<compile_context>
chip_gen: v6e
topology: v6e:2x2x1
jax: 0.10.0
libtpu: 0.0.40
codegen_flags: <defaults>
</compile_context>

<pallas_src>
import functools
import math

import jax
import jax.numpy as jnp
from jax import lax
from jax.experimental import pallas as pl
from jax.experimental.pallas import tpu as pltpu


def _round_up(x, m):
    return ((x + m - 1) // m) * m


# ---------------------------------------------------------------------------
# Fast path: embedding table resident in VMEM, gather via dynamic VMEM reads.
# ---------------------------------------------------------------------------
def _vmem_gather_kernel(ids_ref, table_ref, out_ref, *, scale, tile_tokens,
                        vocab_size):
    # ids_ref:   (N_pad,)  int32  SMEM (scalar prefetch)
    # table_ref: (V, D)    VMEM   (fetched once, resident across the grid)
    # out_ref:   (tile, D) VMEM   output block
    base = pl.multiple_of(pl.program_id(0) * tile_tokens, tile_tokens)
    sub = 8  # sublane-aligned store granularity

    def body(c, carry):
        rows = []
        for j in range(sub):  # statically unrolled: 8 gathers per group
            tok = ids_ref[base + c * sub + j]
            tok = jnp.minimum(jnp.maximum(tok, 0), vocab_size - 1)
            rows.append(table_ref[pl.ds(tok, 1), :])
        block = jnp.concatenate(rows, axis=0) * scale          # (8, D)
        out_ref[pl.ds(pl.multiple_of(c * sub, sub), sub), :] = (
            block.astype(out_ref.dtype))
        return carry

    lax.fori_loop(0, tile_tokens // sub, body, None)


# ---------------------------------------------------------------------------
# Fallback path: table in HBM, chunked row-DMA gather straight into out_ref.
# ---------------------------------------------------------------------------
def _hbm_gather_kernel(ids_ref, table_hbm, out_ref, sem, *, scale,
                       tile_tokens, chunk, vocab_size):
    # ids_ref:   (N_pad,)  int32  SMEM (scalar prefetch)
    # table_hbm: (V, D)    HBM ref (memory_space=pl.ANY), manual row DMAs
    # out_ref:   (tile, D) VMEM   output block (rows DMA'd directly into it)
    # sem:       (2,)      DMA semaphores, one per in-flight chunk parity
    base = pl.multiple_of(pl.program_id(0) * tile_tokens, tile_tokens)
    n_chunks = tile_tokens // chunk

    def issue_chunk(cc):
        slot = cc & 1
        off = cc * chunk

        def issue_row(t, carry):
            tok = ids_ref[base + off + t]
            tok = jnp.minimum(jnp.maximum(tok, 0), vocab_size - 1)
            pltpu.make_async_copy(table_hbm.at[tok], out_ref.at[off + t],
                                  sem.at[slot]).start()
            return carry

        lax.fori_loop(0, chunk, issue_row, None, unroll=True)

    def wait_chunk(cc):
        # Aggregate wait: one (chunk, D)-shaped descriptor retires all `chunk`
        # row copies issued on this chunk's semaphore (DMA sems count bytes).
        slot = cc & 1
        pltpu.make_async_copy(table_hbm.at[pl.ds(0, chunk)],
                              out_ref.at[pl.ds(cc * chunk, chunk)],
                              sem.at[slot]).wait()

    # Prime the pipeline, then per chunk: prefetch next chunk's rows, drain
    # the current chunk, and scale it in place while the next is in flight.
    issue_chunk(0)

    def step(c, carry):
        @pl.when(c + 1 < n_chunks)
        def _():
            issue_chunk(c + 1)

        wait_chunk(c)
        sl = pl.ds(pl.multiple_of(c * chunk, chunk), chunk)
        out_ref[sl, :] = (out_ref[sl, :] * scale).astype(out_ref.dtype)
        return carry

    lax.fori_loop(0, n_chunks, step, None)


# ---------------------------------------------------------------------------
# Wrapper
# ---------------------------------------------------------------------------
_DEFAULT_TILE = 512                       # tokens per grid step (upper bound)
_VMEM_TABLE_BYTES_MAX = 12 * 1024 * 1024  # fast-path threshold (v7x-safe)
_VMEM_BUDGET_BYTES = 24 * 1024 * 1024     # table + double-buffered out block


def token_embedding(ids, table, *, tile_tokens=None, force_hbm_gather=False):
    """ids: (B, S) int; table: (vocab, d_embed) -> (B, S, d_embed)."""
    B, S = ids.shape
    V, D = table.shape
    N = B * S

    itemsize = jnp.dtype(table.dtype).itemsize
    row_bytes = D * itemsize
    table_bytes = V * row_bytes
    use_vmem_table = (not force_hbm_gather) and table_bytes <= _VMEM_TABLE_BYTES_MAX

    # ---- tile sizing in bytes (respects v7x's smaller VMEM) ----
    avail = max(_VMEM_BUDGET_BYTES - (table_bytes if use_vmem_table else 0),
                16 * row_bytes)
    max_tile = max(8, (avail // (2 * row_bytes)) // 8 * 8)  # 2x: out dbl-buffer
    tile = _DEFAULT_TILE if tile_tokens is None else tile_tokens
    tile = max(8, min(tile, max_tile))
    tile = min(tile, _round_up(N, 8))
    # Keep >= 2 grid steps when possible so the "parallel" token-tile axis can
    # split across both v7x TensorCores.
    if N > 8 and _round_up(N, tile) // tile < 2:
        tile = max(8, _round_up(pl.cdiv(N, 2), 8))
    tile = _round_up(tile, 8)
    N_pad = _round_up(N, tile)
    grid = (N_pad // tile,)
    chunk = 32 if tile % 32 == 0 else 8   # HBM path: rows per pipelined chunk

    ids_flat = ids.reshape(-1).astype(jnp.int32)
    if N_pad != N:
        ids_flat = jnp.pad(ids_flat, (0, N_pad - N))  # pad id 0 (valid row)

    scale = float(math.sqrt(D))

    used_vmem = (table_bytes if use_vmem_table else 0) + 2 * tile * row_bytes
    vmem_limit = int(min(56 * 1024 * 1024,
                         max(2 * used_vmem, 16 * 1024 * 1024)))

    cost = pl.CostEstimate(
        flops=N_pad * D,
        transcendentals=0,
        bytes_accessed=(table_bytes if use_vmem_table else N_pad * row_bytes)
                       + N_pad * row_bytes + N_pad * 4,
    )

    if use_vmem_table:
        kernel = functools.partial(_vmem_gather_kernel, scale=scale,
                                   tile_tokens=tile, vocab_size=V)
        grid_spec = pltpu.PrefetchScalarGridSpec(
            num_scalar_prefetch=1,                               # ids -> SMEM
            grid=grid,
            in_specs=[
                pl.BlockSpec((V, D), lambda i, ids: (0, 0)),     # resident table
            ],
            out_specs=pl.BlockSpec((tile, D), lambda i, ids: (i, 0)),
            scratch_shapes=[],
        )
    else:
        kernel = functools.partial(_hbm_gather_kernel, scale=scale,
                                   tile_tokens=tile, chunk=chunk, vocab_size=V)
        grid_spec = pltpu.PrefetchScalarGridSpec(
            num_scalar_prefetch=1,                               # ids -> SMEM
            grid=grid,
            in_specs=[
                pl.BlockSpec(memory_space=pl.ANY),               # table in HBM
            ],
            out_specs=pl.BlockSpec((tile, D), lambda i, ids: (i, 0)),
            scratch_shapes=[
                pltpu.SemaphoreType.DMA((2,)),                   # per-parity sems
            ],
        )

    out_flat = pl.pallas_call(
        kernel,
        out_shape=jax.ShapeDtypeStruct((N_pad, D), table.dtype),
        grid_spec=grid_spec,
        compiler_params=pltpu.CompilerParams(
            dimension_semantics=("parallel",),
            vmem_limit_bytes=vmem_limit),
        cost_estimate=cost,
    )(ids_flat, table)

    return out_flat[:N].reshape(B, S, D)


if __name__ == "__main__":
    # Small shapes consistent with the module's forward.
    batch, seq = 2, 8
    vocab_size, d_embed = 32, 128
    padding_idx = 0

    key = jax.random.PRNGKey(0)
    k_tab, k_ids = jax.random.split(key)

    # nn.Embedding init: N(0, 1); padding_idx row zeroed.
    table = jax.random.normal(k_tab, (vocab_size, d_embed), dtype=jnp.float32)
    table = table.at[padding_idx].set(0.0)

    # Token ids, including possible padding tokens (id 0).
    ids = jax.random.randint(k_ids, (batch, seq), 0, vocab_size, dtype=jnp.int32)

    # Pure-JAX reference: gather + scale.
    ref = jnp.take(table, ids, axis=0) * math.sqrt(d_embed)

    # 1) Fast path: table resident in VMEM.
    out = jax.block_until_ready(token_embedding(ids, table))
    assert out.shape == (batch, seq, d_embed)
    assert out.dtype == jnp.float32
    assert jnp.allclose(out, ref, atol=1e-5, rtol=1e-5)

    # 2) Pad-to-tile path (N not a multiple of 8).
    ids2 = jax.random.randint(jax.random.PRNGKey(1), (2, 7), 0, vocab_size,
                              dtype=jnp.int32)
    out2 = jax.block_until_ready(token_embedding(ids2, table))
    ref2 = jnp.take(table, ids2, axis=0) * math.sqrt(d_embed)
    assert out2.shape == (2, 7, d_embed)
    assert jnp.allclose(out2, ref2, atol=1e-5, rtol=1e-5)

    # 3) Large-vocab fallback (HBM row-DMA gather), forced on the small table.
    out3 = jax.block_until_ready(token_embedding(ids, table,
                                                 force_hbm_gather=True))
    assert jnp.allclose(out3, ref, atol=1e-5, rtol=1e-5)

    print("KERNEL_OK")
</pallas_src>

<mosaic_0001>
module attributes {stable_mosaic.version = 11 : i64} {
  func.func @_vmem_gather_kernel(%arg0: i32, %arg1: memref<16xi32, #tpu.memory_space<smem>>, %arg2: memref<32x128xf32, #tpu.memory_space<vmem>>, %arg3: memref<8x128xf32, #tpu.memory_space<vmem>>) attributes {dimension_semantics = [#tpu.dimension_semantics<parallel>], iteration_bounds = array<i64: 2>, scalar_prefetch = 1 : i64, scratch_operands = 0 : i64, tpu.core_type = #tpu.core_type<tc>, window_params = [{pipeline_mode = #tpu.pipeline_mode<synchronous>, transform_indices = @transform_0, window_bounds = array<i64: 32, 128>}, {transform_indices = @transform_1, window_bounds = array<i64: 8, 128>}]} {
    %c8_i32 = arith.constant 8 : i32
    %0 = arith.muli %arg0, %c8_i32 : i32
    %1 = tpu.assume_multiple %0, 8 : i32
    %c0_i32 = arith.constant 0 : i32
    %c8_i32_0 = arith.constant 8 : i32
    %2 = arith.muli %c0_i32, %c8_i32_0 : i32
    %3 = arith.addi %1, %2 : i32
    %c0_i32_1 = arith.constant 0 : i32
    %4 = arith.addi %3, %c0_i32_1 : i32
    %5 = arith.index_cast %4 : i32 to index
    %6 = memref.load %arg1[%5] : memref<16xi32, #tpu.memory_space<smem>>
    %c0_i32_2 = arith.constant 0 : i32
    %7 = arith.maxsi %6, %c0_i32_2 : i32
    %c31_i32 = arith.constant 31 : i32
    %8 = arith.minsi %7, %c31_i32 : i32
    %9 = arith.index_cast %8 : i32 to index
    %c0 = arith.constant 0 : index
    %10 = vector.load %arg2[%9, %c0] : memref<32x128xf32, #tpu.memory_space<vmem>>, vector<1x128xf32>
    %c8_i32_3 = arith.constant 8 : i32
    %11 = arith.muli %c0_i32, %c8_i32_3 : i32
    %12 = arith.addi %1, %11 : i32
    %c1_i32 = arith.constant 1 : i32
    %13 = arith.addi %12, %c1_i32 : i32
    %14 = arith.index_cast %13 : i32 to index
    %15 = memref.load %arg1[%14] : memref<16xi32, #tpu.memory_space<smem>>
    %c0_i32_4 = arith.constant 0 : i32
    %16 = arith.maxsi %15, %c0_i32_4 : i32
    %c31_i32_5 = arith.constant 31 : i32
    %17 = arith.minsi %16, %c31_i32_5 : i32
    %18 = arith.index_cast %17 : i32 to index
    %c0_6 = arith.constant 0 : index
    %19 = vector.load %arg2[%18, %c0_6] : memref<32x128xf32, #tpu.memory_space<vmem>>, vector<1x128xf32>
    %c8_i32_7 = arith.constant 8 : i32
    %20 = arith.muli %c0_i32, %c8_i32_7 : i32
    %21 = arith.addi %1, %20 : i32
    %c2_i32 = arith.constant 2 : i32
    %22 = arith.addi %21, %c2_i32 : i32
    %23 = arith.index_cast %22 : i32 to index
    %24 = memref.load %arg1[%23] : memref<16xi32, #tpu.memory_space<smem>>
    %c0_i32_8 = arith.constant 0 : i32
    %25 = arith.maxsi %24, %c0_i32_8 : i32
    %c31_i32_9 = arith.constant 31 : i32
    %26 = arith.minsi %25, %c31_i32_9 : i32
    %27 = arith.index_cast %26 : i32 to index
    %c0_10 = arith.constant 0 : index
    %28 = vector.load %arg2[%27, %c0_10] : memref<32x128xf32, #tpu.memory_space<vmem>>, vector<1x128xf32>
    %c8_i32_11 = arith.constant 8 : i32
    %29 = arith.muli %c0_i32, %c8_i32_11 : i32
    %30 = arith.addi %1, %29 : i32
    %c3_i32 = arith.constant 3 : i32
    %31 = arith.addi %30, %c3_i32 : i32
    %32 = arith.index_cast %31 : i32 to index
    %33 = memref.load %arg1[%32] : memref<16xi32, #tpu.memory_space<smem>>
    %c0_i32_12 = arith.constant 0 : i32
    %34 = arith.maxsi %33, %c0_i32_12 : i32
    %c31_i32_13 = arith.constant 31 : i32
    %35 = arith.minsi %34, %c31_i32_13 : i32
    %36 = arith.index_cast %35 : i32 to index
    %c0_14 = arith.constant 0 : index
    %37 = vector.load %arg2[%36, %c0_14] : memref<32x128xf32, #tpu.memory_space<vmem>>, vector<1x128xf32>
    %c8_i32_15 = arith.constant 8 : i32
    %38 = arith.muli %c0_i32, %c8_i32_15 : i32
    %39 = arith.addi %1, %38 : i32
    %c4_i32 = arith.constant 4 : i32
    %40 = arith.addi %39, %c4_i32 : i32
    %41 = arith.index_cast %40 : i32 to index
    %42 = memref.load %arg1[%41] : memref<16xi32, #tpu.memory_space<smem>>
    %c0_i32_16 = arith.constant 0 : i32
    %43 = arith.maxsi %42, %c0_i32_16 : i32
    %c31_i32_17 = arith.constant 31 : i32
    %44 = arith.minsi %43, %c31_i32_17 : i32
    %45 = arith.index_cast %44 : i32 to index
    %c0_18 = arith.constant 0 : index
    %46 = vector.load %arg2[%45, %c0_18] : memref<32x128xf32, #tpu.memory_space<vmem>>, vector<1x128xf32>
    %c8_i32_19 = arith.constant 8 : i32
    %47 = arith.muli %c0_i32, %c8_i32_19 : i32
    %48 = arith.addi %1, %47 : i32
    %c5_i32 = arith.constant 5 : i32
    %49 = arith.addi %48, %c5_i32 : i32
    %50 = arith.index_cast %49 : i32 to index
    %51 = memref.load %arg1[%50] : memref<16xi32, #tpu.memory_space<smem>>
    %c0_i32_20 = arith.constant 0 : i32
    %52 = arith.maxsi %51, %c0_i32_20 : i32
    %c31_i32_21 = arith.constant 31 : i32
    %53 = arith.minsi %52, %c31_i32_21 : i32
    %54 = arith.index_cast %53 : i32 to index
    %c0_22 = arith.constant 0 : index
    %55 = vector.load %arg2[%54, %c0_22] : memref<32x128xf32, #tpu.memory_space<vmem>>, vector<1x128xf32>
    %c8_i32_23 = arith.constant 8 : i32
    %56 = arith.muli %c0_i32, %c8_i32_23 : i32
    %57 = arith.addi %1, %56 : i32
    %c6_i32 = arith.constant 6 : i32
    %58 = arith.addi %57, %c6_i32 : i32
    %59 = arith.index_cast %58 : i32 to index
    %60 = memref.load %arg1[%59] : memref<16xi32, #tpu.memory_space<smem>>
    %c0_i32_24 = arith.constant 0 : i32
    %61 = arith.maxsi %60, %c0_i32_24 : i32
    %c31_i32_25 = arith.constant 31 : i32
    %62 = arith.minsi %61, %c31_i32_25 : i32
    %63 = arith.index_cast %62 : i32 to index
    %c0_26 = arith.constant 0 : index
    %64 = vector.load %arg2[%63, %c0_26] : memref<32x128xf32, #tpu.memory_space<vmem>>, vector<1x128xf32>
    %c8_i32_27 = arith.constant 8 : i32
    %65 = arith.muli %c0_i32, %c8_i32_27 : i32
    %66 = arith.addi %1, %65 : i32
    %c7_i32 = arith.constant 7 : i32
    %67 = arith.addi %66, %c7_i32 : i32
    %68 = arith.index_cast %67 : i32 to index
    %69 = memref.load %arg1[%68] : memref<16xi32, #tpu.memory_space<smem>>
    %c0_i32_28 = arith.constant 0 : i32
    %70 = arith.maxsi %69, %c0_i32_28 : i32
    %c31_i32_29 = arith.constant 31 : i32
    %71 = arith.minsi %70, %c31_i32_29 : i32
    %72 = arith.index_cast %71 : i32 to index
    %c0_30 = arith.constant 0 : index
    %73 = vector.load %arg2[%72, %c0_30] : memref<32x128xf32, #tpu.memory_space<vmem>>, vector<1x128xf32>
    %74 = tpu.concatenate %10, %19, %28, %37, %46, %55, %64, %73 in 0 : vector<1x128xf32>, vector<1x128xf32>, vector<1x128xf32>, vector<1x128xf32>, vector<1x128xf32>, vector<1x128xf32>, vector<1x128xf32>, vector<1x128xf32> -> vector<8x128xf32>
    %cst = arith.constant 11.3137083 : f32
    %75 = vector.broadcast %cst : f32 to vector<8x128xf32>
    %76 = arith.mulf %74, %75 : vector<8x128xf32>
    %c8_i32_31 = arith.constant 8 : i32
    %77 = arith.muli %c0_i32, %c8_i32_31 : i32
    %78 = tpu.assume_multiple %77, 8 : i32
    %79 = arith.index_cast %78 : i32 to index
    %c0_32 = arith.constant 0 : index
    %80 = vector.load %arg3[%79, %c0_32] : memref<8x128xf32, #tpu.memory_space<vmem>>, vector<8x128xf32>
    tpu.vector_store %arg3[%79, %c0_32], %76 {strides = array<i32>} : memref<8x128xf32, #tpu.memory_space<vmem>>, vector<8x128xf32>,
    %c1_i32_33 = arith.constant 1 : i32
    return
  }
  func.func @transform_0(%arg0: i32, %arg1: memref<16xi32, #tpu.memory_space<smem>>) -> (i32, i32) {
    %c0_i32 = arith.constant 0 : i32
    %c0_i32_0 = arith.constant 0 : i32
    %c0_i32_1 = arith.constant 0 : i32
    return %c0_i32, %c0_i32_0 : i32, i32
  }
  func.func @transform_1(%arg0: i32, %arg1: memref<16xi32, #tpu.memory_space<smem>>) -> (i32, i32) {
    %c0_i32 = arith.constant 0 : i32
    %c0_i32_0 = arith.constant 0 : i32
    return %arg0, %c0_i32 : i32, i32
  }
}

</mosaic_0001>

<llo_original>
// kernel: tpu_custom_call.1
$region0: #{tpu_custom_call.1}
  #allocation0 [shape = 'u32[]', space=smem, size = 0x4, offset = 0x4, fixed_abs, tag = 'smem constant byte address 0x4 - core index']
  #allocation1 [shape = 'u32[144,128]{1,0:T(1,128)}', space=vmem, size = 0x12000, scoped, tag = 'internal scratch']
  #allocation2 [shape = 's32[1]{0}', space=sflag, size = 0x4, scoped, tag = 'scoped memory for tpu_custom_call.1']
  #allocation3 [shape = 'u8[512]{0}', space=smem, size = 0x200, scoped, tag = 'prefetched SMEM operand 0']
  %s0 = inlined_call_operand.hbm [shape: s32[16], index: 0, kind: input, shape index: {}]
  %s1 = inlined_call_operand.hbm [shape: f32[32,128], index: 1, kind: input, shape index: {}]
  %s2 = inlined_call_operand.hbm [shape: f32[16,128], index: 2, kind: output, shape index: {}]
  %s3 = sld [smem:[#allocation0]]
  $region41: #{tpu_custom_call.1} parent=0
    _
  %s5 = ssub.s32 1, %s3
  %s6 = scalar_select 0, %s5, %s3
  %8 = dma.hbm_to_smem %s0, 16, [#allocation3], [#allocation2]
  %9 = dma.done [#allocation2], 16
  %10 = sfence
  $region1: #{tpu_custom_call.1} parent=0
    #allocation4 [shape = 'u8[16384]{0}', space=vmem, size = 0x4000, scoped, tag = 'input window, operand 1, single buffered']
    #allocation5 [shape = 's32[2]{0}', space=sflag, size = 0x8, scoped, tag = 'scoped memory for tpu_custom_call.1']
    #allocation6 [shape = 's32[2]{0}', space=sflag, size = 0x8, scoped, tag = 'scoped memory for tpu_custom_call.1']
    #allocation7 [shape = 'u8[8192]{0}', space=vmem, size = 0x2000, scoped, tag = 'output window, operand 0']
    %11 = vsyncpa [#allocation5], 0
    %12 = vsyncpa [#allocation6], 0
    %s13 = scalar_lea.sflag [#allocation6], 1
    %14 = vsyncpa %s13, 0
    loop: start=0, step=1, limit=4
    $region2: #{tpu_custom_call.1} parent=1 // loop_pre_header
      _
    $region3: #{tpu_custom_call.1} parent=1 // loop_header
      %s16 = sphi 0, %s20
      %p17 = scmp.ge.s32.totalorder %s16, 4
      %s24 = sphi 0, %s24
      %s26 = sphi 0, %s24
      %s27 = sphi 0, %s26
      %s41 = sphi 0, %s27
      %s47 = sphi 0, %s49
      %s50 = sphi 0, %s47
      %s51 = sphi 0, %s50
      %s67 = sphi 0, %s51
    $region4: #{tpu_custom_call.1} parent=1 // loop_header_branch
      %19 = sbr.rel (%p17) target = $region8
    $region5: #{tpu_custom_call.1} parent=1 // loop_body
      %s21 = ssub.s32 %s16, 1
      %s22 = ssub.s32 %s16, 2
      %s23 = sadd.s32 %s16, 1
      %s25 = sadd.s32 %s24, 1
      %p28 = scmp.eq.s32.totalorder %s16, 1
      %p29 = scmp.ne.s32.totalorder %s24, %s26
      %p30 = scmp.eq.s32.totalorder %s16, 0
      %p31 = por %p29, %p30
      %p32 = scmp.ne.s32.totalorder %s24, %s26
      %p33 = scmp.eq.s32.totalorder %s21, 1
      %p34 = por %p32, %p33
      %p35 = scmp.ne.s32.totalorder %s26, %s27
      %p36 = scmp.eq.s32.totalorder %s21, 0
      %p37 = por %p35, %p36
      %p38 = scmp.ne.s32.totalorder %s26, %s27
      %p39 = scmp.eq.s32.totalorder %s22, 1
      %p40 = por %p38, %p39
      %p42 = scmp.ne.s32.totalorder %s27, %s41
      %p43 = scmp.eq.s32.totalorder %s22, 0
      %p44 = por %p42, %p43
      %s45 = ssub.s32 %s16, %s23
      %p46 = scmp.eq.s32.totalorder %s45, 0
      %s48 = sadd.s32 %s47, 1
      %s49 = scalar_select %p46, %s47, %s48
      %p52 = pneg %p46
      %p53 = scmp.eq.s32.totalorder %s16, 1
      %p54 = por %p52, %p53
      %p55 = scmp.ne.s32.totalorder %s47, %s50
      %p56 = scmp.eq.s32.totalorder %s16, 0
      %p57 = por %p55, %p56
      %p58 = scmp.ne.s32.totalorder %s47, %s50
      %p59 = scmp.eq.s32.totalorder %s21, 1
      %p60 = por %p58, %p59
      %p61 = scmp.ne.s32.totalorder %s50, %s51
      %p62 = scmp.eq.s32.totalorder %s21, 0
      %p63 = por %p61, %p62
      %p64 = scmp.ne.s32.totalorder %s50, %s51
      %p65 = scmp.eq.s32.totalorder %s22, 1
      %p66 = por %p64, %p65
      %p68 = scmp.ne.s32.totalorder %s51, %s67
      %p69 = scmp.eq.s32.totalorder %s22, 0
      %p70 = por %p68, %p69
      %p71 = scmp.le.s32.totalorder 1, %s16
      %p72 = scmp.lt.s32.totalorder %s16, 3
      %p73 = pnand %p71, %p72
      %p74 = pneg %p73
      // Predicated region
      $region9: #{tpu_custom_call.1} parent=5 // pred_check
        _
      $region10: #{tpu_custom_call.1} parent=5 // pred_check_branch
        %76 = sbr.rel (%p73) target = $region12
      $region11: #{tpu_custom_call.1} parent=5 // pred_region
        %s77 = ssub.s32 %s16, 1
        // Predicated region
        $region13: #{tpu_custom_call.1} parent=11 // pred_check
          %p78 = pneg %p37
        $region14: #{tpu_custom_call.1} parent=11 // pred_check_branch
          %80 = sbr.rel (%p78) target = $region16
        $region15: #{tpu_custom_call.1} parent=11 // pred_region
          %s82 = ssub.s32 512, 512
          %83 = vsyncadd [#allocation5], %s82
          %s84 = sshll.u32 [#allocation4], 4
          %s85 = int_to_ptr.vmem [resolvable:$true] %s84
          %90 = dma.hbm_to_vmem [thread:$0]  %s1, 512, %s85, [#allocation5], 128, 128, 8
        $region16: #{tpu_custom_call.1} parent=11 // pred_fallthru
          _
      $region12: #{tpu_custom_call.1} parent=5 // pred_fallthru
        _
      %p91 = scmp.lt.s32.totalorder %s16, 2
      // Predicated region
      $region17: #{tpu_custom_call.1} parent=5 // pred_check
        %p92 = pneg %p91
      $region18: #{tpu_custom_call.1} parent=5 // pred_check_branch
        %94 = sbr.rel (%p92) target = $region20
      $region19: #{tpu_custom_call.1} parent=5 // pred_region
        _
      $region20: #{tpu_custom_call.1} parent=5 // pred_fallthru
        _
      %p95 = scmp.le.s32.totalorder 1, %s16
      %p96 = scmp.lt.s32.totalorder %s16, 3
      %p97 = pnand %p95, %p96
      %p98 = pneg %p97
      // Predicated region
      $region21: #{tpu_custom_call.1} parent=5 // pred_check
        _
      $region22: #{tpu_custom_call.1} parent=5 // pred_check_branch
        %100 = sbr.rel (%p97) target = $region24
      $region23: #{tpu_custom_call.1} parent=5 // pred_region
        %s101 = ssub.s32 %s16, 1
        // Predicated region
        $region25: #{tpu_custom_call.1} parent=23 // pred_check
          %p102 = pneg %p37
        $region26: #{tpu_custom_call.1} parent=23 // pred_check_branch
          %104 = sbr.rel (%p102) target = $region28
        $region27: #{tpu_custom_call.1} parent=23 // pred_region
          %105 = dma.done [#allocation5], 512
        $region28: #{tpu_custom_call.1} parent=23 // pred_fallthru
          _
        %p106 = pneg %p37
        %p107 = pneg %p34
        %p108 = pneg %p63
        %p109 = pneg %p60
        %s110 = sand.u32 %s50, 1
        %s111 = scalar_lea.sflag [#allocation6], %s110
        %s112 = sand.u32 %s50, 1
        %s113 = smul.addr %s112, 8
        %s114 = scalar_lea.vmem [#allocation7], %s113
        %s115 = smul.u32 %s21, 8
        %s116 = sld [smem:[#allocation3 + %s115]]
        %p117 = scmp.gt.s32.totalorder %s116, 0
        %s118 = scalar_select %p117, %s116, 0
        %p119 = scmp.lt.s32.totalorder %s118, 31
        %s120 = scalar_select %p119, %s118, 31
        %s121 = scalar_lea.vmem [#allocation4], %s120
        %v122 = vld [vmem:[%s121] sm:$0x1]
        %s123 = sadd.s32 %s115, 1
        %s124 = sld [smem:[#allocation3 + %s123]]
        %p125 = scmp.gt.s32.totalorder %s124, 0
        %s126 = scalar_select %p125, %s124, 0
        %p127 = scmp.lt.s32.totalorder %s126, 31
        %s128 = scalar_select %p127, %s126, 31
        %s129 = scalar_lea.vmem [#allocation4], %s128
        %v130 = vld [vmem:[%s129] sm:$0x1]
        %s131 = sadd.s32 %s115, 2
        %s132 = sld [smem:[#allocation3 + %s131]]
        %p133 = scmp.gt.s32.totalorder %s132, 0
        %s134 = scalar_select %p133, %s132, 0
        %p135 = scmp.lt.s32.totalorder %s134, 31
        %s136 = scalar_select %p135, %s134, 31
        %s137 = scalar_lea.vmem [#allocation4], %s136
        %v138 = vld [vmem:[%s137] sm:$0x1]
        %s139 = sadd.s32 %s115, 3
        %s140 = sld [smem:[#allocation3 + %s139]]
        %p141 = scmp.gt.s32.totalorder %s140, 0
        %s142 = scalar_select %p141, %s140, 0
        %p143 = scmp.lt.s32.totalorder %s142, 31
        %s144 = scalar_select %p143, %s142, 31
        %s145 = scalar_lea.vmem [#allocation4], %s144
        %v146 = vld [vmem:[%s145] sm:$0x1]
        %s147 = sadd.s32 %s115, 4
        %s148 = sld [smem:[#allocation3 + %s147]]
        %p149 = scmp.gt.s32.totalorder %s148, 0
        %s150 = scalar_select %p149, %s148, 0
        %p151 = scmp.lt.s32.totalorder %s150, 31
        %s152 = scalar_select %p151, %s150, 31
        %s153 = scalar_lea.vmem [#allocation4], %s152
        %v154 = vld [vmem:[%s153] sm:$0x1]
        %s155 = sadd.s32 %s115, 5
        %s156 = sld [smem:[#allocation3 + %s155]]
        %p157 = scmp.gt.s32.totalorder %s156, 0
        %s158 = scalar_select %p157, %s156, 0
        %p159 = scmp.lt.s32.totalorder %s158, 31
        %s160 = scalar_select %p159, %s158, 31
        %s161 = scalar_lea.vmem [#allocation4], %s160
        %v162 = vld [vmem:[%s161] sm:$0x1]
        %s163 = sadd.s32 %s115, 6
        %s164 = sld [smem:[#allocation3 + %s163]]
        %p165 = scmp.gt.s32.totalorder %s164, 0
        %s166 = scalar_select %p165, %s164, 0
        %p167 = scmp.lt.s32.totalorder %s166, 31
        %s168 = scalar_select %p167, %s166, 31
        %s169 = scalar_lea.vmem [#allocation4], %s168
        %v170 = vld [vmem:[%s169] sm:$0x1]
        %s171 = sadd.s32 %s115, 7
        %s172 = sld [smem:[#allocation3 + %s171]]
        %p173 = scmp.gt.s32.totalorder %s172, 0
        %s174 = scalar_select %p173, %s172, 0
        %p175 = scmp.lt.s32.totalorder %s174, 31
        %s176 = scalar_select %p175, %s174, 31
        %s177 = scalar_lea.vmem [#allocation4], %s176
        %v178 = vld [vmem:[%s177] sm:$0x1]
        %v180 = vrot.slane %v130, 7
        %v183 = vrot.slane %v138, 6
        %v186 = vrot.slane %v146, 5
        %v189 = vrot.slane %v154, 4
        %v192 = vrot.slane %v162, 3
        %v195 = vrot.slane %v170, 2
        %v198 = vrot.slane %v178, 1
        %vm200 = vcmask 1040384
        %v201 = vsel %vm200, %v122, %v180
        %vm202 = vcmask 1041408
        %v203 = vsel %vm202, %v201, %v183
        %vm204 = vcmask 1042432
        %v205 = vsel %vm204, %v203, %v186
        %vm206 = vcmask 1043456
        %v207 = vsel %vm206, %v205, %v189
        %vm208 = vcmask 1044480
        %v209 = vsel %vm208, %v207, %v192
        %vm210 = vcmask 1045504
        %v211 = vsel %vm210, %v209, %v195
        %vm212 = vcmask 1046528
        %v213 = vsel %vm212, %v211, %v198
        %v214 = vmul.f32 %v213, 11.313708
        %215 = vst [vmem:[%s114] sm:$0xff] %v214
        %s216 = sand.u32 %s50, 1
        %s217 = scalar_lea.sflag [#allocation6], %s216
        %s218 = sand.u32 %s50, 1
        %s219 = smul.addr %s218, 8
        %s220 = scalar_lea.vmem [#allocation7], %s219
        // Predicated region
        $region29: #{tpu_custom_call.1} parent=23 // pred_check
          %p221 = pneg %p60
        $region30: #{tpu_custom_call.1} parent=23 // pred_check_branch
          %223 = sbr.rel (%p221) target = $region32
        $region31: #{tpu_custom_call.1} parent=23 // pred_region
          %s225 = ssub.s32 128, 128
          %226 = vsyncadd %s217, %s225
          %s227 = smul.addr %s21, 128
          %s228 = scalar_lea.hbm %s2, %s227
          %s230 = sshll.u32 %s220, 4
          %s231 = int_to_ptr.vmem [resolvable:$true] %s230
          %233 = dma.vmem_to_hbm [thread:$0]  %s231, 128, %s228, %s217
        $region32: #{tpu_custom_call.1} parent=23 // pred_fallthru
          _
      $region24: #{tpu_custom_call.1} parent=5 // pred_fallthru
        _
      %p234 = scmp.le.s32.totalorder 2, %s16
      // Predicated region
      $region33: #{tpu_custom_call.1} parent=5 // pred_check
        %p235 = pneg %p234
      $region34: #{tpu_custom_call.1} parent=5 // pred_check_branch
        %237 = sbr.rel (%p235) target = $region36
      $region35: #{tpu_custom_call.1} parent=5 // pred_region
        %s238 = ssub.s32 %s16, 2
        // Predicated region
        $region37: #{tpu_custom_call.1} parent=35 // pred_check
          %p239 = pneg %p66
        $region38: #{tpu_custom_call.1} parent=35 // pred_check_branch
          %241 = sbr.rel (%p239) target = $region40
        $region39: #{tpu_custom_call.1} parent=35 // pred_region
          %s242 = sand.u32 %s51, 1
          %s243 = scalar_lea.sflag [#allocation6], %s242
          %s244 = sand.u32 %s51, 1
          %s245 = smul.addr %s244, 8
          %s246 = scalar_lea.vmem [#allocation7], %s245
          %247 = dma.done %s243, 128
        $region40: #{tpu_custom_call.1} parent=35 // pred_fallthru
          _
      $region36: #{tpu_custom_call.1} parent=5 // pred_fallthru
        _
    $region6: #{tpu_custom_call.1} parent=1 // loop_footer
      %s20 = sadd.s32 1, %s16
    $region7: #{tpu_custom_call.1} parent=1 // loop_footer_branch
      %15 = sbr.rel target = $region3
    $region8: #{tpu_custom_call.1} parent=1 // loop_exit
      _
    %248 = vsyncpa [#allocation5], 1
    %s249 = scalar_lea.sflag [#allocation5], 1
    %250 = vsyncpa %s249, 1
    %251 = vsyncpa [#allocation6], 1
    %s252 = scalar_lea.sflag [#allocation6], 1
    %253 = vsyncpa %s252, 1

</llo_original>
